<compile_context>
chip_gen: v5e
topology: v5e:2x2
jax: 0.10.0
libtpu: 0.0.40
codegen_flags: <defaults>
</compile_context>

<pallas_src>
import jax
import jax.numpy as jnp
from jax.experimental import pallas as pl
from jax.experimental.pallas import tpu as pltpu


# --------------------------------------------------------------------------- #
# Helpers
# --------------------------------------------------------------------------- #
def _round_up(x, m):
    return ((x + m - 1) // m) * m


def _sublane_tile(itemsize):
    # 32-bit dtypes -> 8 sublanes, 16-bit -> 16, 8-bit -> 32.
    return max(8, 32 // max(int(itemsize), 1))


def _padded_in_block_bytes(bt, c, t_hw, itemsize, sub):
    # VMEM footprint of one (bt, c, t_hw) input block: each (c, t_hw) slab is
    # tiled to (sublane_tile, 128) per leading index.
    return bt * _round_up(c, sub) * _round_up(t_hw, 128) * itemsize


def _vmem_capacity_bytes():
    """Physical VMEM per TensorCore; conservative (64 MiB) if unknown."""
    try:
        info = pltpu.get_tpu_info()
        for attr in ("vmem_capacity_bytes", "vmem_bytes", "vmem_size_bytes"):
            v = getattr(info, attr, None)
            if v:
                return int(v)
    except Exception:
        pass
    try:
        kind = jax.devices()[0].device_kind.lower()
        if ("v5" in kind) or ("v6" in kind):
            return 128 * 1024 * 1024
    except Exception:
        pass
    return 64 * 1024 * 1024


# --------------------------------------------------------------------------- #
# Kernel
# --------------------------------------------------------------------------- #
def _make_pool_kernel(hw_total, t_hw, needs_mask, inv_hw, inv_cm1):
    """Build the kernel body with static configuration closed over."""

    def kernel(x_ref, o_ref, acc_ref):
        # x_ref  : (bt, C, t_hw)  input chunk (native dtype)
        # o_ref  : (bt, 2)        output [mu, std]; resident across the k axis
        # acc_ref: (bt, C) f32    per-channel partial spatial sums
        k = pl.program_id(1)
        last = pl.num_programs(1) - 1

        @pl.when(k == 0)
        def _init():
            acc_ref[...] = jnp.zeros_like(acc_ref)

        if needs_mask:
            # Only the final (partial) HW chunk pays for iota+cmp+select; every
            # full chunk takes the cheap astype+sum path.
            @pl.when(k < last)
            def _acc_full():
                acc_ref[...] += jnp.sum(x_ref[...].astype(jnp.float32), axis=-1)

            @pl.when(k == last)
            def _acc_tail():
                chunk = x_ref[...].astype(jnp.float32)
                lane = jax.lax.broadcasted_iota(jnp.int32, chunk.shape, 2)
                valid = (k * t_hw + lane) < hw_total
                acc_ref[...] += jnp.sum(jnp.where(valid, chunk, 0.0), axis=-1)
        else:
            acc_ref[...] += jnp.sum(x_ref[...].astype(jnp.float32), axis=-1)

        @pl.when(k == last)
        def _finalize():
            ch_means = acc_ref[...] * inv_hw                             # (bt, C)
            mu = jnp.mean(ch_means, axis=-1, keepdims=True)              # (bt, 1)
            var = jnp.sum((ch_means - mu) ** 2, axis=-1,
                          keepdims=True) * inv_cm1
            std = jnp.sqrt(var)                                          # (bt, 1)
            # Pack [mu, std] into the (bt, 2) output tile; runs once per batch
            # block on a tiny tile so the select cost is negligible.
            col = jax.lax.broadcasted_iota(jnp.int32, (o_ref.shape[0], 2), 1)
            o_ref[...] = jnp.where(col == 0, mu, std).astype(o_ref.dtype)

    return kernel


# --------------------------------------------------------------------------- #
# Tiling
# --------------------------------------------------------------------------- #
def _choose_tiles(n, c, hw, itemsize, target_block_bytes):
    """Pick (bt, t_hw).

    Legality invariants:
      * bt is N, 1, or a multiple of the dtype sublane tile (never 2..sub-1),
      * t_hw is hw (full extent) or a multiple of 128.
    """
    sub = _sublane_tile(itemsize)
    batch_row_bytes = _padded_in_block_bytes(1, c, hw, itemsize, sub)

    if batch_row_bytes <= target_block_bytes:
        # Small/medium feature maps: whole HW per step, several N per block.
        fit = max(1, target_block_bytes // batch_row_bytes)
        if fit >= n:
            if n >= 2 * sub:
                # Split the batch ("parallel") axis into >=2 legal blocks so
                # both v7x TensorCores get work (neutral on v5e/v6e).
                bt = max(sub, (((n + 1) // 2) // sub) * sub)
            else:
                bt = n
        elif fit >= sub:
            bt = (fit // sub) * sub
        else:
            bt = 1                       # avoid the 2..sub-1 sublane hazard
        return min(bt, n), hw

    # Large feature maps: minimal legal batch group per block, chunk HW.
    if n <= sub:
        bt = 1                           # also yields >=2 batch blocks for n>=2
    elif _padded_in_block_bytes(sub, c, 128, itemsize, sub) <= target_block_bytes:
        bt = sub
    else:
        bt = 1                           # huge-C corner: one batch per block

    if hw <= 128:
        t_hw = hw
    else:
        lanes = target_block_bytes // max(bt * _round_up(c, sub) * itemsize, 1)
        t_hw = int(max(128, (lanes // 128) * 128))
        t_hw = min(t_hw, _round_up(hw, 128))
        if t_hw >= hw:
            t_hw = hw
    return bt, t_hw


# --------------------------------------------------------------------------- #
# Wrapper
# --------------------------------------------------------------------------- #
def _xla_pool(x, flatten):
    """Pure-XLA path for tiny inputs (nothing to pipeline)."""
    n, c = x.shape[0], x.shape[1]
    ch = jnp.mean(x.astype(jnp.float32), axis=(2, 3))                 # (N, C)
    mu = jnp.mean(ch, axis=1, keepdims=True)                          # (N, 1)
    inv_cm1 = (1.0 / float(c - 1)) if c > 1 else float("nan")
    var = jnp.sum((ch - mu) ** 2, axis=1, keepdims=True) * inv_cm1
    out = jnp.concatenate([mu, jnp.sqrt(var)], axis=1).astype(x.dtype)
    return out if flatten else out.reshape(n, 2, 1)


def global_avg_mean_std_stack_pool2d(x, flatten=True, *,
                                     target_block_bytes=None,
                                     min_pallas_bytes=2 * 1024 * 1024):
    """x: (N, C, H, W) -> (N, 2) if flatten else (N, 2, 1)."""
    n, c, h, w = x.shape
    hw = h * w
    itemsize = jnp.dtype(x.dtype).itemsize
    total_bytes = n * c * hw * itemsize

    # Tiny problems: pallas_call fixed overhead + a single unpipelined DMA
    # dominate, and grid=(1,1) can't use v7x's second TensorCore anyway.
    if total_bytes < min_pallas_bytes:
        return _xla_pool(x, flatten)

    vmem_cap = _vmem_capacity_bytes()
    if target_block_bytes is None:
        # ~14 MiB blocks on v7x (64 MiB VMEM/TC), ~24 MiB on v5e/v6e (128 MiB).
        target_block_bytes = (14 if vmem_cap <= 64 * 1024 * 1024 else 24) * 1024 * 1024
    scoped_cap = (48 if vmem_cap <= 64 * 1024 * 1024 else 96) * 1024 * 1024

    sub = _sublane_tile(itemsize)
    bt, t_hw = _choose_tiles(n, c, hw, itemsize, target_block_bytes)
    n_b = pl.cdiv(n, bt)
    n_k = pl.cdiv(hw, t_hw)
    needs_mask = (hw % t_hw) != 0

    inv_hw = 1.0 / float(hw)
    # torch's unbiased std is NaN for C == 1; mirror that instead of crashing.
    inv_cm1 = (1.0 / float(c - 1)) if c > 1 else float("nan")

    kernel = _make_pool_kernel(hw, t_hw, needs_mask, inv_hw, inv_cm1)

    # Scoped-VMEM budget from PADDED footprints (C -> sublane tile, last dim ->
    # 128 lanes), double-buffered where the pipeline double-buffers.
    in_block = _padded_in_block_bytes(bt, c, t_hw, itemsize, sub)
    out_block = _round_up(bt, sub) * 128 * itemsize
    acc_block = _round_up(bt, 8) * _round_up(c, 128) * 4
    vmem_limit = int(min(scoped_cap,
                         max(16 * 1024 * 1024,
                             2 * in_block + 2 * out_block + acc_block
                             + 8 * 1024 * 1024)))

    cost = pl.CostEstimate(
        flops=2 * n * c * hw + 4 * n * c,   # spatial sums + channel moments
        transcendentals=n,                  # one sqrt per batch element
        bytes_accessed=total_bytes + n * 2 * itemsize,
    )

    # TODO(synk): if a producer can hand over NHWC activations, add a
    # C-on-lanes variant (per-channel sum becomes a sublane reduce) for the
    # large-C / tiny-HW pooling regime; not done here to avoid an extra
    # HBM-doubling transpose of NCHW inputs.
    out = pl.pallas_call(
        kernel,
        out_shape=jax.ShapeDtypeStruct((n, 2), x.dtype),
        grid_spec=pltpu.PrefetchScalarGridSpec(
            num_scalar_prefetch=0,
            grid=(n_b, n_k),
            in_specs=[pl.BlockSpec((bt, c, t_hw), lambda b, k: (b, 0, k))],
            out_specs=pl.BlockSpec((bt, 2), lambda b, k: (b, 0)),
            scratch_shapes=[pltpu.VMEM((bt, c), jnp.float32)],
        ),
        compiler_params=pltpu.CompilerParams(
            dimension_semantics=("parallel", "arbitrary"),
            vmem_limit_bytes=vmem_limit,
        ),
        cost_estimate=cost,
    )(x.reshape(n, c, hw))

    if not flatten:
        out = out.reshape(n, 2, 1)
    return out


# --------------------------------------------------------------------------- #
# Reference + tests
# --------------------------------------------------------------------------- #
def _reference(x):
    # Pure-JAX reference matching the PyTorch module (flatten=True).
    ch = jnp.mean(x.astype(jnp.float32), axis=(2, 3))                  # (N, C)
    mu = jnp.mean(ch, axis=1, keepdims=True)                           # (N, 1)
    var = jnp.sum((ch - mu) ** 2, axis=1, keepdims=True) / (x.shape[1] - 1)
    return jnp.concatenate([mu, jnp.sqrt(var)], axis=1).astype(x.dtype)


if __name__ == "__main__":
    key = jax.random.PRNGKey(0)

    # 1) Small shape consistent with the module; force the Pallas kernel
    #    (shapes this tiny would take the XLA fallback by default).
    n, c, h, w = 2, 4, 16, 16
    x = jax.random.normal(key, (n, c, h, w), dtype=jnp.float32)
    out = jax.block_until_ready(
        global_avg_mean_std_stack_pool2d(x, flatten=True, min_pallas_bytes=0))
    ref = _reference(x)
    assert out.shape == (n, 2), out.shape
    assert jnp.allclose(out, ref, atol=1e-5, rtol=1e-5), (out, ref)

    # 2) Chunked-HW reduction: tiny block target forces t_hw=128 chunks over
    #    HW=400 with a masked partial tail chunk (mask gated to last chunk).
    x2 = jax.random.normal(jax.random.PRNGKey(0), (2, 8, 20, 20), jnp.float32)
    out2 = jax.block_until_ready(global_avg_mean_std_stack_pool2d(
        x2, flatten=True, min_pallas_bytes=0, target_block_bytes=4096))
    ref2 = _reference(x2)
    assert out2.shape == (2, 2), out2.shape
    assert jnp.allclose(out2, ref2, atol=1e-5, rtol=1e-5), (out2, ref2)

    # 3) Multiple blocks along the "parallel" batch axis (v7x megacore split).
    x3 = jax.random.normal(jax.random.PRNGKey(1), (16, 32, 14, 14), jnp.float32)
    out3 = jax.block_until_ready(
        global_avg_mean_std_stack_pool2d(x3, flatten=True, min_pallas_bytes=0))
    ref3 = _reference(x3)
    assert out3.shape == (16, 2), out3.shape
    assert jnp.allclose(out3, ref3, atol=1e-5, rtol=1e-5), (out3, ref3)

    # 4) bf16 input (16-sublane tile) and flatten=False output shape.
    x4 = jax.random.normal(jax.random.PRNGKey(2), (4, 16, 8, 8), jnp.bfloat16)
    out4 = jax.block_until_ready(
        global_avg_mean_std_stack_pool2d(x4, flatten=False, min_pallas_bytes=0))
    ref4 = _reference(x4).reshape(4, 2, 1)
    assert out4.shape == (4, 2, 1), out4.shape
    assert jnp.allclose(out4.astype(jnp.float32), ref4.astype(jnp.float32),
                        atol=2e-2, rtol=2e-2), (out4, ref4)

    # 5) Default dispatch on the tiny input exercises the XLA fallback path.
    out5 = jax.block_until_ready(global_avg_mean_std_stack_pool2d(x))
    assert jnp.allclose(out5, ref, atol=1e-5, rtol=1e-5), (out5, ref)

    print("KERNEL_OK")
</pallas_src>

<mosaic_0001>
module attributes {stable_mosaic.version = 11 : i64} {
  func.func @kernel(%arg0: i32, %arg1: i32, %arg2: memref<2x4x256xf32, #tpu.memory_space<vmem>>, %arg3: memref<2x2xf32, #tpu.memory_space<vmem>>, %arg4: memref<2x4xf32, #tpu.memory_space<vmem>>) attributes {dimension_semantics = [#tpu.dimension_semantics<parallel>, #tpu.dimension_semantics<arbitrary>], iteration_bounds = array<i64: 1, 1>, scalar_prefetch = 0 : i64, scratch_operands = 1 : i64, tpu.core_type = #tpu.core_type<tc>, window_params = [{transform_indices = @transform_0, window_bounds = array<i64: 2, 4, 256>}, {transform_indices = @transform_1, window_bounds = array<i64: 2, 2>}]} {
    %c0_i32 = arith.constant 0 : i32
    %0 = arith.cmpi eq, %arg1, %c0_i32 : i32
    %1 = arith.extui %0 : i1 to i32
    %c0_i32_0 = arith.constant 0 : i32
    %2 = arith.cmpi ne, %1, %c0_i32_0 : i32
    scf.if %2 {
      %cst_9 = arith.constant 0.000000e+00 : f32
      %11 = vector.broadcast %cst_9 : f32 to vector<2x4xf32>
      %c0_10 = arith.constant 0 : index
      %c0_11 = arith.constant 0 : index
      %12 = vector.load %arg4[%c0_10, %c0_11] : memref<2x4xf32, #tpu.memory_space<vmem>>, vector<2x4xf32>
      tpu.vector_store %arg4[%c0_10, %c0_11], %11 {strides = array<i32>} : memref<2x4xf32, #tpu.memory_space<vmem>>, vector<2x4xf32>,
    } else {
    }
    %c0 = arith.constant 0 : index
    %c0_1 = arith.constant 0 : index
    %3 = vector.load %arg4[%c0, %c0_1] : memref<2x4xf32, #tpu.memory_space<vmem>>, vector<2x4xf32>
    %c0_2 = arith.constant 0 : index
    %c0_3 = arith.constant 0 : index
    %c0_4 = arith.constant 0 : index
    %4 = vector.load %arg2[%c0_2, %c0_3, %c0_4] : memref<2x4x256xf32, #tpu.memory_space<vmem>>, vector<2x4x256xf32>
    %cst = arith.constant dense<0.000000e+00> : vector<2x4xf32>
    %5 = vector.multi_reduction <add>, %4, %cst [2] : vector<2x4x256xf32> to vector<2x4xf32>
    %6 = arith.addf %3, %5 : vector<2x4xf32>
    %c0_5 = arith.constant 0 : index
    %c0_6 = arith.constant 0 : index
    %7 = vector.load %arg4[%c0_5, %c0_6] : memref<2x4xf32, #tpu.memory_space<vmem>>, vector<2x4xf32>
    tpu.vector_store %arg4[%c0_5, %c0_6], %6 {strides = array<i32>} : memref<2x4xf32, #tpu.memory_space<vmem>>, vector<2x4xf32>,
    %c0_i32_7 = arith.constant 0 : i32
    %8 = arith.cmpi eq, %arg1, %c0_i32_7 : i32
    %9 = arith.extui %8 : i1 to i32
    %c0_i32_8 = arith.constant 0 : i32
    %10 = arith.cmpi ne, %9, %c0_i32_8 : i32
    scf.if %10 {
      %c0_9 = arith.constant 0 : index
      %c0_10 = arith.constant 0 : index
      %11 = vector.load %arg4[%c0_9, %c0_10] : memref<2x4xf32, #tpu.memory_space<vmem>>, vector<2x4xf32>
      %cst_11 = arith.constant 3.906250e-03 : f32
      %12 = vector.broadcast %cst_11 : f32 to vector<2x4xf32>
      %13 = arith.mulf %11, %12 : vector<2x4xf32>
      %cst_12 = arith.constant dense<0.000000e+00> : vector<2xf32>
      %14 = vector.multi_reduction <add>, %13, %cst_12 [1] : vector<2x4xf32> to vector<2xf32>
      %15 = vector.shape_cast %14 : vector<2xf32> to vector<2x1xf32>
      %cst_13 = arith.constant 4.000000e+00 : f32
      %16 = vector.broadcast %cst_13 : f32 to vector<2x1xf32>
      %17 = arith.divf %15, %16 : vector<2x1xf32>
      %18 = vector.broadcast %17 : vector<2x1xf32> to vector<2x4xf32>
      %19 = arith.subf %13, %18 : vector<2x4xf32>
      %20 = arith.mulf %19, %19 : vector<2x4xf32>
      %cst_14 = arith.constant dense<0.000000e+00> : vector<2xf32>
      %21 = vector.multi_reduction <add>, %20, %cst_14 [1] : vector<2x4xf32> to vector<2xf32>
      %22 = vector.shape_cast %21 : vector<2xf32> to vector<2x1xf32>
      %cst_15 = arith.constant 0.333333343 : f32
      %23 = vector.broadcast %cst_15 : f32 to vector<2x1xf32>
      %24 = arith.mulf %22, %23 : vector<2x1xf32>
      %25 = math.sqrt %24 : vector<2x1xf32>
      %26 = tpu.iota {dimensions = array<i32: 1>} : vector<2x2xi32>
      %c0_i32_16 = arith.constant 0 : i32
      %27 = vector.broadcast %c0_i32_16 : i32 to vector<2x2xi32>
      %28 = arith.cmpi eq, %26, %27 : vector<2x2xi32>
      %29 = vector.shape_cast %17 : vector<2x1xf32> to vector<2x1xf32>
      %30 = vector.broadcast %29 : vector<2x1xf32> to vector<2x2xf32>
      %31 = vector.shape_cast %25 : vector<2x1xf32> to vector<2x1xf32>
      %32 = vector.broadcast %31 : vector<2x1xf32> to vector<2x2xf32>
      %33 = arith.select %28, %30, %32 : vector<2x2xi1>, vector<2x2xf32>
      %c0_17 = arith.constant 0 : index
      %c0_18 = arith.constant 0 : index
      %34 = vector.load %arg3[%c0_17, %c0_18] : memref<2x2xf32, #tpu.memory_space<vmem>>, vector<2x2xf32>
      tpu.vector_store %arg3[%c0_17, %c0_18], %33 {strides = array<i32>} : memref<2x2xf32, #tpu.memory_space<vmem>>, vector<2x2xf32>,
    } else {
    }
    return
  }
  func.func @transform_0(%arg0: i32, %arg1: i32) -> (i32, i32, i32) {
    %c0_i32 = arith.constant 0 : i32
    %c0_i32_0 = arith.constant 0 : i32
    return %arg0, %c0_i32, %arg1 : i32, i32, i32
  }
  func.func @transform_1(%arg0: i32, %arg1: i32) -> (i32, i32) {
    %c0_i32 = arith.constant 0 : i32
    %c0_i32_0 = arith.constant 0 : i32
    return %arg0, %c0_i32 : i32, i32
  }
}

</mosaic_0001>

<llo_original>
// kernel: tpu_custom_call.1
$region0: #{tpu_custom_call.1}
  #allocation0 [shape = 'u32[]', space=smem, size = 0x4, offset = 0x4, fixed_abs, tag = 'smem constant byte address 0x4 - core index']
  #allocation1 [shape = 'u32[72,128]{1,0:T(1,128)}', space=vmem, size = 0x9000, scoped, tag = 'internal scratch']
  #allocation2 [shape = 'f32[2,4]{1,0:T(2,128)}', space=vmem, size = 0x400, scoped, tag = 'scratch operand']
  %s0 = inlined_call_operand.hbm [shape: f32[2,4,256], index: 0, kind: input, shape index: {}]
  %s1 = inlined_call_operand.hbm [shape: f32[2,2], index: 1, kind: output, shape index: {}]
  %s2 = sld [smem:[#allocation0]]
  $region26: #{tpu_custom_call.1} parent=0
    _
  %s4 = ssub.s32 1, %s2
  %s5 = scalar_select 0, %s4, %s2
  $region1: #{tpu_custom_call.1} parent=0
    #allocation3 [shape = 'u8[8192]{0}', space=vmem, size = 0x2000, scoped, tag = 'input window, operand 0, single buffered']
    #allocation4 [shape = 's32[1]{0}', space=sflag, size = 0x4, scoped, tag = 'scoped memory for tpu_custom_call.1']
    #allocation5 [shape = 's32[1]{0}', space=sflag, size = 0x4, scoped, tag = 'scoped memory for tpu_custom_call.1']
    #allocation6 [shape = 'u8[1024]{0}', space=vmem, size = 0x400, scoped, tag = 'output window, operand 0, single buffered']
    %6 = vsyncpa [#allocation4], 0
    %7 = vsyncpa [#allocation5], 0
    // Predicated region
    $region2: #{tpu_custom_call.1} parent=1 // pred_check
      _
    $region3: #{tpu_custom_call.1} parent=1 // pred_check_branch
      %9 = sbr.rel (0) target = $region5
    $region4: #{tpu_custom_call.1} parent=1 // pred_region
      %11 = vsyncadd [#allocation4], 0
      %s12 = sshll.u32 %s0, 4
      %s13 = int_to_ptr.hbm [resolvable:$true] %s12
      %s14 = sshll.u32 [#allocation3], 4
      %s15 = int_to_ptr.vmem [resolvable:$true] %s14
      %20 = dma.hbm_to_vmem [thread:$0]  %s13, 256, %s15, [#allocation4], 128, 128, 8
    $region5: #{tpu_custom_call.1} parent=1 // pred_fallthru
      _
    // Predicated region
    $region6: #{tpu_custom_call.1} parent=1 // pred_check
      _
    $region7: #{tpu_custom_call.1} parent=1 // pred_check_branch
      %22 = sbr.rel (0) target = $region9
    $region8: #{tpu_custom_call.1} parent=1 // pred_region
      %24 = dma.done [#allocation4], 256
    $region9: #{tpu_custom_call.1} parent=1 // pred_fallthru
      _
    %p25 = scmp.eq.s32.totalorder 0, 0
    // Predicated region
    $region10: #{tpu_custom_call.1} parent=1 // pred_check
      %p26 = pneg %p25
    $region11: #{tpu_custom_call.1} parent=1 // pred_check_branch
      %28 = sbr.rel (%p26) target = $region13
    $region12: #{tpu_custom_call.1} parent=1 // pred_region
      %vm29 = vcmask 25600
      %30 = vst.msk [vmem:[#allocation2] sm:$0x3] %vm29, 0.0
    $region13: #{tpu_custom_call.1} parent=1 // pred_fallthru
      _
    %v31 = vld [vmem:[#allocation2] sm:$0x3]
    %v32 = vld [vmem:[#allocation3] sm:$0xff]
    %v33 = vld [vmem:[#allocation3 + $0x8] sm:$0xff]
    %36 = vst [vmem:[#allocation1] ss:$2 sm:$0xff] %v32
    %v37 = vld.sshfl [vmem:[#allocation1] sm:$0xff pattern:$0x75316420]
    %v38 = vld.sshfl [vmem:[#allocation1 + $0x8] sm:$0xff pattern:$0x75316420]
    %s39 = scalar_lea.vmem [#allocation1], 16
    %40 = vst [vmem:[%s39] ss:$2 sm:$0xff] %v33
    %v41 = vld.sshfl [vmem:[#allocation1 + $0x10] sm:$0xff pattern:$0x75316420]
    %v42 = vld.sshfl [vmem:[#allocation1 + $0x18] sm:$0xff pattern:$0x75316420]
    %vm47 = vcmask 1043456
    %v48 = vsel %vm47, %v37, 0.0
    %v49 = vsel %vm47, %v38, 0.0
    %v50 = vadd.f32 %v48, %v49
    %51 = vadd.xlane.f32.xlu0 %v50
    %v52 = vpop.xlane.xlu0 %51
    %v53 = vsel %vm47, %v41, 0.0
    %v54 = vsel %vm47, %v42, 0.0
    %v55 = vadd.f32 %v53, %v54
    %56 = vadd.xlane.f32.xlu0 %v55
    %v57 = vpop.xlane.xlu0 %56
    %v60 = vlaneseq
    %v61 = vand.u32 %v60, 127
    %v62 = vperm.slane %v52, %v61
    %v63 = vperm.slane %v57, %v61
    %vm64 = vcmask 1041409
    %v65 = vsel %vm64, %v63, %v62
    %v67 = vadd.f32 %v31, %v65
    %vm68 = vcmask 25600
    %69 = vst.msk [vmem:[#allocation2] sm:$0x3] %vm68, %v67
    // Predicated region
    $region14: #{tpu_custom_call.1} parent=1 // pred_check
      %p70 = pneg %p25
    $region15: #{tpu_custom_call.1} parent=1 // pred_check_branch
      %72 = sbr.rel (%p70) target = $region17
    $region16: #{tpu_custom_call.1} parent=1 // pred_region
      %v73 = vld [vmem:[#allocation2] sm:$0x3]
      %v74 = vmul.f32 %v73, 0.00390625
      %v75 = vsel %vm68, %v74, 0.0
      %76 = vadd.xlane.f32.xlu0 %v75
      %v77 = vpop.xlane.xlu0 %76
      %v78 = vrcp.pop 4.0
      %v79 = vmul.f32 4.0, %v78
      %v80 = vsub.f32 1.0, %v79
      %v81 = vmul.f32 %v78, %v80
      %v82 = vadd.f32 %v78, %v81
      %vm83 = vweird.f32 %v78
      %v84 = vsel %vm83, %v78, %v82
      %v85 = vmul.f32 %v77, %v84
      %v86 = vsub.f32 %v74, %v85
      %v87 = vmul.f32 %v86, %v86
      %v88 = vsel %vm68, %v87, 0.0
      %89 = vadd.xlane.f32.xlu0 %v88
      %v90 = vpop.xlane.xlu0 %89
      %v91 = vmul.f32 %v90, 0.33333334
      %v92 = vrsqrt.pop %v91
      %v93 = vmul.f32 %v92, %v91
      %v94 = vmul.f32 %v93, %v92
      %v95 = vmul.f32 0.5, %v94
      %v96 = vsub.f32 1.5, %v95
      %v97 = vmul.f32 %v92, %v96
      %v98 = vmul.f32 %v91, %v97
      %vm99 = vcmp.eq.f32.partialorder %v91, inf
      %v100 = vsel %vm99, %v91, %v98
      %vm101 = vcmp.eq.f32.partialorder %v91, 0.0
      %v102 = vand.u32 %v91, 2147483648
      %v103 = vsel %vm101, %v102, %v100
      %vm104 = vcmp.eq.s32.totalorder %v61, 0
      %v105 = vsel %vm104, %v85, %v103
      %vm106 = vcmask 9216
      %107 = vst.msk [vmem:[#allocation6] sm:$0x3] %vm106, %v105
    $region17: #{tpu_custom_call.1} parent=1 // pred_fallthru
      _
    // Predicated region
    $region18: #{tpu_custom_call.1} parent=1 // pred_check
      _
    $region19: #{tpu_custom_call.1} parent=1 // pred_check_branch
      %109 = sbr.rel (0) target = $region21
    $region20: #{tpu_custom_call.1} parent=1 // pred_region
      %111 = vsyncadd [#allocation5], 0
      %s113 = sshll.u32 [#allocation6], 4
      %s114 = int_to_ptr.vmem [resolvable:$true] %s113
      %s115 = sshll.u32 %s1, 4
      %s116 = int_to_ptr.hbm [resolvable:$true] %s115
      %118 = dma.vmem_to_hbm [thread:$0]  %s114, 32, %s116, [#allocation5]
    $region21: #{tpu_custom_call.1} parent=1 // pred_fallthru
      _
    // Predicated region
    $region22: #{tpu_custom_call.1} parent=1 // pred_check
      _
    $region23: #{tpu_custom_call.1} parent=1 // pred_check_branch
      %120 = sbr.rel (0) target = $region25
    $region24: #{tpu_custom_call.1} parent=1 // pred_region
      %122 = dma.done [#allocation5], 32
    $region25: #{tpu_custom_call.1} parent=1 // pred_fallthru
      _
    %123 = vsyncpa [#allocation4], 1
    %124 = vsyncpa [#allocation5], 1

</llo_original>
